<compile_context>
chip_gen: v6e
topology: v6e:2x2x1
jax: 0.10.0
libtpu: 0.0.40
codegen_flags: <defaults>
</compile_context>

<pallas_src>
import math

import jax
import jax.numpy as jnp
from jax import lax
from jax.experimental import pallas as pl
from jax.experimental.pallas import tpu as pltpu

# ---------------------------------------------------------------------------
# Config (small, consistent with the module's forward)
# ---------------------------------------------------------------------------
BATCH = 2
SEQ_LEN = 8
EMBED_DIM = 32
NUM_HEADS = 4
HEAD_DIM = EMBED_DIM // NUM_HEADS
SCALE = math.sqrt(EMBED_DIM)          # PyTorch module scales by sqrt(embed_dim)


# ---------------------------------------------------------------------------
# Pallas kernel: one grid step per batch, all heads fused per step
# ---------------------------------------------------------------------------
def _mha_kernel(x_ref, bias_ref, wqkv_ref, bqkv_ref, wo_ref, bo_ref, o_ref):
    # x_ref   : (S, E)          current batch's rows
    # bias_ref: (H*S, H*S)      combined causal + cross-head additive bias
    # wqkv_ref: (E, 3*E)        fused Q/K/V projection weight
    # bqkv_ref: (1, 3*E)        fused Q/K/V bias
    # wo_ref  : (Dh, H*E)       widened output-projection weight
    # bo_ref  : (1, E)          output-projection bias
    # o_ref   : (S, E)
    S, H, Dh, E = SEQ_LEN, NUM_HEADS, HEAD_DIM, EMBED_DIM

    # Fused Q/K/V projection: one (S, E) x (E, 3E) MXU pass.
    qkv = jnp.dot(x_ref[...], wqkv_ref[...],
                  preferred_element_type=jnp.float32) + bqkv_ref[0]      # (S, 3E)

    # Head-major (block-diagonal) layout: (S, H*Dh) -> (H*S, Dh).
    # Lane slices + a sublane-axis concat (both cheap & guaranteed to lower).
    def head_major(col0):
        return jnp.concatenate(
            [qkv[:, col0 + h * Dh: col0 + (h + 1) * Dh] for h in range(H)],
            axis=0)                                                      # (H*S, Dh)

    q_bd = head_major(0 * E)
    k_bd = head_major(1 * E)
    v_bd = head_major(2 * E)

    # All heads' scores in ONE matmul; cross-head blocks and future positions
    # are killed by the precomputed additive bias (finite -1e30, no NaNs).
    s = lax.dot_general(q_bd, k_bd, (((1,), (1,)), ((), ())),
                        preferred_element_type=jnp.float32)              # (H*S, H*S)
    s = s * jnp.float32(1.0 / SCALE) + bias_ref[...]

    # Softmax along the last axis (exact divide — approx reciprocal buys
    # nothing at this size and costs accuracy).
    m = jnp.max(s, axis=-1, keepdims=True)
    e = jnp.exp(s - m)
    p = e / jnp.sum(e, axis=-1, keepdims=True)

    # TODO(synk): attn_drop / resid_drop are identity (eval mode); training
    # dropout would need pltpu.prng_seed/prng_random_bits-based masking.

    # All heads' context vectors in ONE matmul.
    ctx_bd = jnp.dot(p, v_bd, preferred_element_type=jnp.float32)        # (H*S, Dh)

    # Output projection folded across heads via the widened weight:
    #   partial[h*S + s, h'*E + j] = ctx_h[s, :] . wo[h'*Dh:(h'+1)*Dh, j]
    # Summing the diagonal (h' == h) blocks gives out = concat_h(ctx_h) @ wo.
    partial = jnp.dot(ctx_bd, wo_ref[...],
                      preferred_element_type=jnp.float32)                # (H*S, H*E)

    acc = partial[0:S, 0:E]
    for h in range(1, H):
        acc = acc + partial[h * S:(h + 1) * S, h * E:(h + 1) * E]
    o_ref[...] = (acc + bo_ref[0]).astype(o_ref.dtype)


# ---------------------------------------------------------------------------
# One-time parameter preparation (hoisted out of the per-call wrapper)
# ---------------------------------------------------------------------------
def prepare_mha_params(wq, bq, wk, bk, wv, bv, wo, bo):
    """Fuse QKV, widen the output projection, and build the additive bias."""
    E, H, Dh, S = EMBED_DIM, NUM_HEADS, HEAD_DIM, SEQ_LEN

    wqkv = jnp.concatenate([wq, wk, wv], axis=1)                         # (E, 3E)
    bqkv = jnp.concatenate([bq, bk, bv], axis=1)                         # (1, 3E)

    # wo_wide[d, h*E + j] = wo[h*Dh + d, j]
    wo_wide = wo.reshape(H, Dh, E).transpose(1, 0, 2).reshape(Dh, H * E)  # (Dh, H*E)

    # Combined causal + cross-head block-diagonal additive bias for the
    # head-major (H*S, H*S) score slab.
    idx = jnp.arange(H * S)
    h_of, p_of = idx // S, idx % S
    keep = (h_of[:, None] == h_of[None, :]) & (p_of[:, None] >= p_of[None, :])
    mask_bias = jnp.where(keep, 0.0, -1e30).astype(jnp.float32)          # (H*S, H*S)

    return wqkv, bqkv, wo_wide, bo, mask_bias


# ---------------------------------------------------------------------------
# Forward wrapper: only reshapes x; grid over batch ("parallel" for v7x)
# ---------------------------------------------------------------------------
def multi_head_attention(x, wqkv, bqkv, wo_wide, bo, mask_bias):
    """x: (B, S, E) float32, prepared params from prepare_mha_params()."""
    B, S, E = x.shape
    H, Dh = NUM_HEADS, HEAD_DIM
    x2 = x.reshape(B * S, E)

    out = pl.pallas_call(
        _mha_kernel,
        out_shape=jax.ShapeDtypeStruct((B * S, E), x.dtype),
        grid_spec=pltpu.PrefetchScalarGridSpec(
            num_scalar_prefetch=0,
            grid=(B,),
            in_specs=[
                pl.BlockSpec((S, E), lambda b: (b, 0)),                  # x rows of batch b
                pl.BlockSpec((H * S, H * S), lambda b: (0, 0)),          # additive bias
                pl.BlockSpec((E, 3 * E), lambda b: (0, 0)),              # fused QKV weight
                pl.BlockSpec((1, 3 * E), lambda b: (0, 0)),              # fused QKV bias
                pl.BlockSpec((Dh, H * E), lambda b: (0, 0)),             # widened out weight
                pl.BlockSpec((1, E), lambda b: (0, 0)),                  # out bias
            ],
            out_specs=pl.BlockSpec((S, E), lambda b: (b, 0)),
        ),
        compiler_params=pltpu.CompilerParams(
            dimension_semantics=("parallel",)),                          # 2 TCs on v7x
    )(x2, mask_bias, wqkv, bqkv, wo_wide, bo)

    return out.reshape(B, S, E)


# ---------------------------------------------------------------------------
# Pure-JAX reference (mirrors the PyTorch forward, eval mode)
# ---------------------------------------------------------------------------
def _reference(x, wq, bq, wk, bk, wv, bv, wo, bo):
    B, S, E = x.shape
    H, Dh = NUM_HEADS, HEAD_DIM

    def proj(w, b):
        return (x @ w + b[0]).reshape(B, S, H, Dh).transpose(0, 2, 1, 3)

    q, k, v = proj(wq, bq), proj(wk, bk), proj(wv, bv)
    scores = jnp.einsum("bhqd,bhkd->bhqk", q, k) / SCALE
    mask = jnp.tril(jnp.ones((S, S), dtype=bool))
    scores = jnp.where(mask[None, None], scores, -jnp.inf)
    attn = jax.nn.softmax(scores, axis=-1)
    ctx = jnp.einsum("bhqk,bhkd->bhqd", attn, v)
    ctx = ctx.transpose(0, 2, 1, 3).reshape(B, S, E)
    return ctx @ wo + bo[0]


if __name__ == "__main__":
    key = jax.random.PRNGKey(0)
    keys = jax.random.split(key, 9)

    x = jax.random.normal(keys[0], (BATCH, SEQ_LEN, EMBED_DIM), dtype=jnp.float32)

    def mk_w(k):
        return jax.random.normal(k, (EMBED_DIM, EMBED_DIM), dtype=jnp.float32) * 0.02

    def mk_b(k):
        return jax.random.normal(k, (1, EMBED_DIM), dtype=jnp.float32) * 0.02

    wq, bq = mk_w(keys[1]), mk_b(keys[2])
    wk, bk = mk_w(keys[3]), mk_b(keys[4])
    wv, bv = mk_w(keys[5]), mk_b(keys[6])
    wo, bo = mk_w(keys[7]), mk_b(keys[8])

    # One-time weight fusion / widening / mask construction (not per forward).
    wqkv, bqkv, wo_wide, bo_p, mask_bias = jax.block_until_ready(
        prepare_mha_params(wq, bq, wk, bk, wv, bv, wo, bo))

    out = multi_head_attention(x, wqkv, bqkv, wo_wide, bo_p, mask_bias)
    out = jax.block_until_ready(out)

    ref = _reference(x, wq, bq, wk, bk, wv, bv, wo, bo)
    assert out.shape == (BATCH, SEQ_LEN, EMBED_DIM)
    # Exact softmax divide -> tight tolerance again.
    assert jnp.allclose(out, ref, atol=1e-4, rtol=1e-4), "mismatch vs reference"

    print("KERNEL_OK")
</pallas_src>

<mosaic_0001>
module attributes {stable_mosaic.version = 11 : i64} {
  func.func @_mha_kernel(%arg0: i32, %arg1: memref<8x32xf32, #tpu.memory_space<vmem>>, %arg2: memref<32x32xf32, #tpu.memory_space<vmem>>, %arg3: memref<32x96xf32, #tpu.memory_space<vmem>>, %arg4: memref<1x96xf32, #tpu.memory_space<vmem>>, %arg5: memref<8x128xf32, #tpu.memory_space<vmem>>, %arg6: memref<1x32xf32, #tpu.memory_space<vmem>>, %arg7: memref<8x32xf32, #tpu.memory_space<vmem>>) attributes {dimension_semantics = [#tpu.dimension_semantics<parallel>], iteration_bounds = array<i64: 2>, scalar_prefetch = 0 : i64, scratch_operands = 0 : i64, tpu.core_type = #tpu.core_type<tc>, window_params = [{transform_indices = @transform_0, window_bounds = array<i64: 8, 32>}, {pipeline_mode = #tpu.pipeline_mode<synchronous>, transform_indices = @transform_1, window_bounds = array<i64: 32, 32>}, {pipeline_mode = #tpu.pipeline_mode<synchronous>, transform_indices = @transform_2, window_bounds = array<i64: 32, 96>}, {pipeline_mode = #tpu.pipeline_mode<synchronous>, transform_indices = @transform_3, window_bounds = array<i64: 1, 96>}, {pipeline_mode = #tpu.pipeline_mode<synchronous>, transform_indices = @transform_4, window_bounds = array<i64: 8, 128>}, {pipeline_mode = #tpu.pipeline_mode<synchronous>, transform_indices = @transform_5, window_bounds = array<i64: 1, 32>}, {transform_indices = @transform_6, window_bounds = array<i64: 8, 32>}]} {
    %c0 = arith.constant 0 : index
    %c0_0 = arith.constant 0 : index
    %0 = vector.load %arg1[%c0, %c0_0] : memref<8x32xf32, #tpu.memory_space<vmem>>, vector<8x32xf32>
    %c0_1 = arith.constant 0 : index
    %c0_2 = arith.constant 0 : index
    %1 = vector.load %arg3[%c0_1, %c0_2] : memref<32x96xf32, #tpu.memory_space<vmem>>, vector<32x96xf32>
    %cst = arith.constant dense<0.000000e+00> : vector<8x96xf32>
    %2 = tpu.matmul %0, %1, %cst {dimension_numbers = #tpu.dot_dimension_numbers<[1], [0], [0], [1], [0, 0, 1, 1], [], []>} : vector<8x32xf32>, vector<32x96xf32>, vector<8x96xf32> -> vector<8x96xf32>
    %c0_3 = arith.constant 0 : index
    %c0_4 = arith.constant 0 : index
    %3 = vector.load %arg4[%c0_3, %c0_4] : memref<1x96xf32, #tpu.memory_space<vmem>>, vector<1x96xf32>
    %4 = vector.shape_cast %3 : vector<1x96xf32> to vector<96xf32>
    %5 = vector.shape_cast %4 : vector<96xf32> to vector<1x96xf32>
    %6 = vector.broadcast %5 : vector<1x96xf32> to vector<8x96xf32>
    %7 = arith.addf %2, %6 : vector<8x96xf32>
    %8 = vector.extract_strided_slice %7 {offsets = [0, 0], sizes = [8, 8], strides = [1, 1]} : vector<8x96xf32> to vector<8x8xf32>
    %9 = vector.extract_strided_slice %7 {offsets = [0, 8], sizes = [8, 8], strides = [1, 1]} : vector<8x96xf32> to vector<8x8xf32>
    %10 = vector.extract_strided_slice %7 {offsets = [0, 16], sizes = [8, 8], strides = [1, 1]} : vector<8x96xf32> to vector<8x8xf32>
    %11 = vector.extract_strided_slice %7 {offsets = [0, 24], sizes = [8, 8], strides = [1, 1]} : vector<8x96xf32> to vector<8x8xf32>
    %12 = tpu.concatenate %8, %9, %10, %11 in 0 : vector<8x8xf32>, vector<8x8xf32>, vector<8x8xf32>, vector<8x8xf32> -> vector<32x8xf32>
    %13 = vector.extract_strided_slice %7 {offsets = [0, 32], sizes = [8, 8], strides = [1, 1]} : vector<8x96xf32> to vector<8x8xf32>
    %14 = vector.extract_strided_slice %7 {offsets = [0, 40], sizes = [8, 8], strides = [1, 1]} : vector<8x96xf32> to vector<8x8xf32>
    %15 = vector.extract_strided_slice %7 {offsets = [0, 48], sizes = [8, 8], strides = [1, 1]} : vector<8x96xf32> to vector<8x8xf32>
    %16 = vector.extract_strided_slice %7 {offsets = [0, 56], sizes = [8, 8], strides = [1, 1]} : vector<8x96xf32> to vector<8x8xf32>
    %17 = tpu.concatenate %13, %14, %15, %16 in 0 : vector<8x8xf32>, vector<8x8xf32>, vector<8x8xf32>, vector<8x8xf32> -> vector<32x8xf32>
    %18 = vector.extract_strided_slice %7 {offsets = [0, 64], sizes = [8, 8], strides = [1, 1]} : vector<8x96xf32> to vector<8x8xf32>
    %19 = vector.extract_strided_slice %7 {offsets = [0, 72], sizes = [8, 8], strides = [1, 1]} : vector<8x96xf32> to vector<8x8xf32>
    %20 = vector.extract_strided_slice %7 {offsets = [0, 80], sizes = [8, 8], strides = [1, 1]} : vector<8x96xf32> to vector<8x8xf32>
    %21 = vector.extract_strided_slice %7 {offsets = [0, 88], sizes = [8, 8], strides = [1, 1]} : vector<8x96xf32> to vector<8x8xf32>
    %22 = tpu.concatenate %18, %19, %20, %21 in 0 : vector<8x8xf32>, vector<8x8xf32>, vector<8x8xf32>, vector<8x8xf32> -> vector<32x8xf32>
    %cst_5 = arith.constant dense<0.000000e+00> : vector<32x32xf32>
    %23 = tpu.matmul %12, %17, %cst_5 {dimension_numbers = #tpu.dot_dimension_numbers<[1], [1], [0], [0], [0, 0, 1, 0], [], []>} : vector<32x8xf32>, vector<32x8xf32>, vector<32x32xf32> -> vector<32x32xf32>
    %cst_6 = arith.constant 0.176776692 : f32
    %24 = vector.broadcast %cst_6 : f32 to vector<32x32xf32>
    %25 = arith.mulf %23, %24 : vector<32x32xf32>
    %c0_7 = arith.constant 0 : index
    %c0_8 = arith.constant 0 : index
    %26 = vector.load %arg2[%c0_7, %c0_8] : memref<32x32xf32, #tpu.memory_space<vmem>>, vector<32x32xf32>
    %27 = arith.addf %25, %26 : vector<32x32xf32>
    %cst_9 = arith.constant dense<0xFF800000> : vector<32xf32>
    %28 = vector.multi_reduction <maximumf>, %27, %cst_9 [1] : vector<32x32xf32> to vector<32xf32>
    %29 = vector.shape_cast %28 : vector<32xf32> to vector<32x1xf32>
    %30 = vector.broadcast %29 : vector<32x1xf32> to vector<32x32xf32>
    %31 = arith.subf %27, %30 : vector<32x32xf32>
    %32 = math.exp %31 : vector<32x32xf32>
    %cst_10 = arith.constant dense<0.000000e+00> : vector<32xf32>
    %33 = vector.multi_reduction <add>, %32, %cst_10 [1] : vector<32x32xf32> to vector<32xf32>
    %34 = vector.shape_cast %33 : vector<32xf32> to vector<32x1xf32>
    %35 = vector.broadcast %34 : vector<32x1xf32> to vector<32x32xf32>
    %36 = arith.divf %32, %35 : vector<32x32xf32>
    %cst_11 = arith.constant dense<0.000000e+00> : vector<32x8xf32>
    %37 = tpu.matmul %36, %22, %cst_11 {dimension_numbers = #tpu.dot_dimension_numbers<[1], [0], [0], [1], [0, 0, 1, 1], [], []>} : vector<32x32xf32>, vector<32x8xf32>, vector<32x8xf32> -> vector<32x8xf32>
    %c0_12 = arith.constant 0 : index
    %c0_13 = arith.constant 0 : index
    %38 = vector.load %arg5[%c0_12, %c0_13] : memref<8x128xf32, #tpu.memory_space<vmem>>, vector<8x128xf32>
    %cst_14 = arith.constant dense<0.000000e+00> : vector<32x128xf32>
    %39 = tpu.matmul %37, %38, %cst_14 {dimension_numbers = #tpu.dot_dimension_numbers<[1], [0], [0], [1], [0, 0, 1, 1], [], []>} : vector<32x8xf32>, vector<8x128xf32>, vector<32x128xf32> -> vector<32x128xf32>
    %40 = vector.extract_strided_slice %39 {offsets = [0, 0], sizes = [8, 32], strides = [1, 1]} : vector<32x128xf32> to vector<8x32xf32>
    %41 = vector.extract_strided_slice %39 {offsets = [8, 32], sizes = [8, 32], strides = [1, 1]} : vector<32x128xf32> to vector<8x32xf32>
    %42 = arith.addf %40, %41 : vector<8x32xf32>
    %43 = vector.extract_strided_slice %39 {offsets = [16, 64], sizes = [8, 32], strides = [1, 1]} : vector<32x128xf32> to vector<8x32xf32>
    %44 = arith.addf %42, %43 : vector<8x32xf32>
    %45 = vector.extract_strided_slice %39 {offsets = [24, 96], sizes = [8, 32], strides = [1, 1]} : vector<32x128xf32> to vector<8x32xf32>
    %46 = arith.addf %44, %45 : vector<8x32xf32>
    %c0_15 = arith.constant 0 : index
    %c0_16 = arith.constant 0 : index
    %47 = vector.load %arg6[%c0_15, %c0_16] : memref<1x32xf32, #tpu.memory_space<vmem>>, vector<1x32xf32>
    %48 = vector.shape_cast %47 : vector<1x32xf32> to vector<32xf32>
    %49 = vector.shape_cast %48 : vector<32xf32> to vector<1x32xf32>
    %50 = vector.broadcast %49 : vector<1x32xf32> to vector<8x32xf32>
    %51 = arith.addf %46, %50 : vector<8x32xf32>
    %c0_17 = arith.constant 0 : index
    %c0_18 = arith.constant 0 : index
    %52 = vector.load %arg7[%c0_17, %c0_18] : memref<8x32xf32, #tpu.memory_space<vmem>>, vector<8x32xf32>
    tpu.vector_store %arg7[%c0_17, %c0_18], %51 {strides = array<i32>} : memref<8x32xf32, #tpu.memory_space<vmem>>, vector<8x32xf32>,
    return
  }
  func.func @transform_0(%arg0: i32) -> (i32, i32) {
    %c0_i32 = arith.constant 0 : i32
    %c0_i32_0 = arith.constant 0 : i32
    return %arg0, %c0_i32 : i32, i32
  }
  func.func @transform_1(%arg0: i32) -> (i32, i32) {
    %c0_i32 = arith.constant 0 : i32
    %c0_i32_0 = arith.constant 0 : i32
    %c0_i32_1 = arith.constant 0 : i32
    return %c0_i32, %c0_i32_0 : i32, i32
  }
  func.func @transform_2(%arg0: i32) -> (i32, i32) {
    %c0_i32 = arith.constant 0 : i32
    %c0_i32_0 = arith.constant 0 : i32
    %c0_i32_1 = arith.constant 0 : i32
    return %c0_i32, %c0_i32_0 : i32, i32
  }
  func.func @transform_3(%arg0: i32) -> (i32, i32) {
    %c0_i32 = arith.constant 0 : i32
    %c0_i32_0 = arith.constant 0 : i32
    %c0_i32_1 = arith.constant 0 : i32
    return %c0_i32, %c0_i32_0 : i32, i32
  }
  func.func @transform_4(%arg0: i32) -> (i32, i32) {
    %c0_i32 = arith.constant 0 : i32
    %c0_i32_0 = arith.constant 0 : i32
    %c0_i32_1 = arith.constant 0 : i32
    return %c0_i32, %c0_i32_0 : i32, i32
  }
  func.func @transform_5(%arg0: i32) -> (i32, i32) {
    %c0_i32 = arith.constant 0 : i32
    %c0_i32_0 = arith.constant 0 : i32
    %c0_i32_1 = arith.constant 0 : i32
    return %c0_i32, %c0_i32_0 : i32, i32
  }
  func.func @transform_6(%arg0: i32) -> (i32, i32) {
    %c0_i32 = arith.constant 0 : i32
    %c0_i32_0 = arith.constant 0 : i32
    return %arg0, %c0_i32 : i32, i32
  }
}

</mosaic_0001>

<llo_original>
// kernel: tpu_custom_call.1
$region0: #{tpu_custom_call.1}
  #allocation0 [shape = 'u32[]', space=smem, size = 0x4, offset = 0x4, fixed_abs, tag = 'smem constant byte address 0x4 - core index']
  #allocation1 [shape = 'u32[144,128]{1,0:T(1,128)}', space=vmem, size = 0x12000, scoped, tag = 'internal scratch']
  %s0 = inlined_call_operand.hbm [shape: f32[16,32], index: 0, kind: input, shape index: {}]
  %s1 = inlined_call_operand.hbm [shape: f32[32,32], index: 1, kind: input, shape index: {}]
  %s2 = inlined_call_operand.hbm [shape: f32[32,96], index: 2, kind: input, shape index: {}]
  %s3 = inlined_call_operand.vmem [shape: f32[1,96], index: 3, kind: input, shape index: {}]
  %s4 = inlined_call_operand.hbm [shape: f32[8,128], index: 4, kind: input, shape index: {}]
  %s5 = inlined_call_operand.vmem [shape: f32[1,32], index: 5, kind: input, shape index: {}]
  %s6 = inlined_call_operand.hbm [shape: f32[16,32], index: 6, kind: output, shape index: {}]
  %s7 = sld [smem:[#allocation0]]
  $region73: #{tpu_custom_call.1} parent=0
    _
  %s9 = ssub.s32 1, %s7
  %s10 = scalar_select 0, %s9, %s7
  $region1: #{tpu_custom_call.1} parent=0
    #allocation2 [shape = 'u8[8192]{0}', space=vmem, size = 0x2000, scoped, tag = 'input window, operand 0']
    #allocation3 [shape = 's32[2]{0}', space=sflag, size = 0x8, scoped, tag = 'scoped memory for tpu_custom_call.1']
    #allocation4 [shape = 's32[2]{0}', space=sflag, size = 0x8, scoped, tag = 'scoped memory for tpu_custom_call.1']
    #allocation5 [shape = 'u8[16384]{0}', space=vmem, size = 0x4000, scoped, tag = 'input window, operand 1, single buffered']
    #allocation6 [shape = 's32[1]{0}', space=sflag, size = 0x4, scoped, tag = 'scoped memory for tpu_custom_call.1']
    #allocation7 [shape = 'u8[16384]{0}', space=vmem, size = 0x4000, scoped, tag = 'input window, operand 2, single buffered']
    #allocation8 [shape = 'u8[4096]{0}', space=vmem, size = 0x1000, scoped, tag = 'input window, operand 4, single buffered']
    #allocation9 [shape = 's32[1]{0}', space=sflag, size = 0x4, scoped, tag = 'scoped memory for tpu_custom_call.1']
    #allocation10 [shape = 'u8[8192]{0}', space=vmem, size = 0x2000, scoped, tag = 'output window, operand 0']
    %11 = vsyncpa [#allocation3], 0
    %s12 = scalar_lea.sflag [#allocation3], 1
    %13 = vsyncpa %s12, 0
    %14 = vsyncpa [#allocation6], 0
    %15 = vsyncpa [#allocation9], 0
    %16 = vsyncpa [#allocation4], 0
    %s17 = scalar_lea.sflag [#allocation4], 1
    %18 = vsyncpa %s17, 0
    loop: start=0, step=1, limit=4
    $region2: #{tpu_custom_call.1} parent=1 // loop_pre_header
      _
    $region3: #{tpu_custom_call.1} parent=1 // loop_header
      %s20 = sphi 0, %s24
      %p21 = scmp.ge.s32.totalorder %s20, 4
      %s30 = sphi 0, %s32
      %s33 = sphi 0, %s30
      %s34 = sphi 0, %s33
      %s50 = sphi 0, %s34
      %s54 = sphi 0, %s54
      %s56 = sphi 0, %s54
      %s57 = sphi 0, %s56
      %s71 = sphi 0, %s57
      %s75 = sphi 0, %s75
      %s77 = sphi 0, %s75
      %s78 = sphi 0, %s77
      %s92 = sphi 0, %s78
      %s96 = sphi 0, %s96
      %s98 = sphi 0, %s96
      %s99 = sphi 0, %s98
      %s113 = sphi 0, %s99
      %s117 = sphi 0, %s117
      %s119 = sphi 0, %s117
      %s120 = sphi 0, %s119
      %s134 = sphi 0, %s120
      %s138 = sphi 0, %s138
      %s140 = sphi 0, %s138
      %s141 = sphi 0, %s140
      %s155 = sphi 0, %s141
      %s161 = sphi 0, %s163
      %s164 = sphi 0, %s161
      %s165 = sphi 0, %s164
      %s181 = sphi 0, %s165
    $region4: #{tpu_custom_call.1} parent=1 // loop_header_branch
      %23 = sbr.rel (%p21) target = $region8
    $region5: #{tpu_custom_call.1} parent=1 // loop_body
      %s25 = ssub.s32 %s20, 1
      %s26 = ssub.s32 %s20, 2
      %s27 = sadd.s32 %s20, 1
      %s28 = ssub.s32 %s20, %s27
      %p29 = scmp.eq.s32.totalorder %s28, 0
      %s31 = sadd.s32 %s30, 1
      %s32 = scalar_select %p29, %s30, %s31
      %p35 = pneg %p29
      %p36 = scmp.eq.s32.totalorder %s20, 1
      %p37 = por %p35, %p36
      %p38 = scmp.ne.s32.totalorder %s30, %s33
      %p39 = scmp.eq.s32.totalorder %s20, 0
      %p40 = por %p38, %p39
      %p41 = scmp.ne.s32.totalorder %s30, %s33
      %p42 = scmp.eq.s32.totalorder %s25, 1
      %p43 = por %p41, %p42
      %p44 = scmp.ne.s32.totalorder %s33, %s34
      %p45 = scmp.eq.s32.totalorder %s25, 0
      %p46 = por %p44, %p45
      %p47 = scmp.ne.s32.totalorder %s33, %s34
      %p48 = scmp.eq.s32.totalorder %s26, 1
      %p49 = por %p47, %p48
      %p51 = scmp.ne.s32.totalorder %s34, %s50
      %p52 = scmp.eq.s32.totalorder %s26, 0
      %p53 = por %p51, %p52
      %s55 = sadd.s32 %s54, 1
      %p58 = scmp.eq.s32.totalorder %s20, 1
      %p59 = scmp.ne.s32.totalorder %s54, %s56
      %p60 = scmp.eq.s32.totalorder %s20, 0
      %p61 = por %p59, %p60
      %p62 = scmp.ne.s32.totalorder %s54, %s56
      %p63 = scmp.eq.s32.totalorder %s25, 1
      %p64 = por %p62, %p63
      %p65 = scmp.ne.s32.totalorder %s56, %s57
      %p66 = scmp.eq.s32.totalorder %s25, 0
      %p67 = por %p65, %p66
      %p68 = scmp.ne.s32.totalorder %s56, %s57
      %p69 = scmp.eq.s32.totalorder %s26, 1
      %p70 = por %p68, %p69
      %p72 = scmp.ne.s32.totalorder %s57, %s71
      %p73 = scmp.eq.s32.totalorder %s26, 0
      %p74 = por %p72, %p73
      %s76 = sadd.s32 %s75, 1
      %p79 = scmp.eq.s32.totalorder %s20, 1
      %p80 = scmp.ne.s32.totalorder %s75, %s77
      %p81 = scmp.eq.s32.totalorder %s20, 0
      %p82 = por %p80, %p81
      %p83 = scmp.ne.s32.totalorder %s75, %s77
      %p84 = scmp.eq.s32.totalorder %s25, 1
      %p85 = por %p83, %p84
      %p86 = scmp.ne.s32.totalorder %s77, %s78
      %p87 = scmp.eq.s32.totalorder %s25, 0
      %p88 = por %p86, %p87
      %p89 = scmp.ne.s32.totalorder %s77, %s78
      %p90 = scmp.eq.s32.totalorder %s26, 1
      %p91 = por %p89, %p90
      %p93 = scmp.ne.s32.totalorder %s78, %s92
      %p94 = scmp.eq.s32.totalorder %s26, 0
      %p95 = por %p93, %p94
      %s97 = sadd.s32 %s96, 1
      %p100 = scmp.eq.s32.totalorder %s20, 1
      %p101 = scmp.ne.s32.totalorder %s96, %s98
      %p102 = scmp.eq.s32.totalorder %s20, 0
      %p103 = por %p101, %p102
      %p104 = scmp.ne.s32.totalorder %s96, %s98
      %p105 = scmp.eq.s32.totalorder %s25, 1
      %p106 = por %p104, %p105
      %p107 = scmp.ne.s32.totalorder %s98, %s99
      %p108 = scmp.eq.s32.totalorder %s25, 0
      %p109 = por %p107, %p108
      %p110 = scmp.ne.s32.totalorder %s98, %s99
      %p111 = scmp.eq.s32.totalorder %s26, 1
      %p112 = por %p110, %p111
      %p114 = scmp.ne.s32.totalorder %s99, %s113
      %p115 = scmp.eq.s32.totalorder %s26, 0
      %p116 = por %p114, %p115
      %s118 = sadd.s32 %s117, 1
      %p121 = scmp.eq.s32.totalorder %s20, 1
      %p122 = scmp.ne.s32.totalorder %s117, %s119
      %p123 = scmp.eq.s32.totalorder %s20, 0
      %p124 = por %p122, %p123
      %p125 = scmp.ne.s32.totalorder %s117, %s119
      %p126 = scmp.eq.s32.totalorder %s25, 1
      %p127 = por %p125, %p126
      %p128 = scmp.ne.s32.totalorder %s119, %s120
      %p129 = scmp.eq.s32.totalorder %s25, 0
      %p130 = por %p128, %p129
      %p131 = scmp.ne.s32.totalorder %s119, %s120
      %p132 = scmp.eq.s32.totalorder %s26, 1
      %p133 = por %p131, %p132
      %p135 = scmp.ne.s32.totalorder %s120, %s134
      %p136 = scmp.eq.s32.totalorder %s26, 0
      %p137 = por %p135, %p136
      %s139 = sadd.s32 %s138, 1
      %p142 = scmp.eq.s32.totalorder %s20, 1
      %p143 = scmp.ne.s32.totalorder %s138, %s140
      %p144 = scmp.eq.s32.totalorder %s20, 0
      %p145 = por %p143, %p144
      %p146 = scmp.ne.s32.totalorder %s138, %s140
      %p147 = scmp.eq.s32.totalorder %s25, 1
      %p148 = por %p146, %p147
      %p149 = scmp.ne.s32.totalorder %s140, %s141
      %p150 = scmp.eq.s32.totalorder %s25, 0
      %p151 = por %p149, %p150
      %p152 = scmp.ne.s32.totalorder %s140, %s141
      %p153 = scmp.eq.s32.totalorder %s26, 1
      %p154 = por %p152, %p153
      %p156 = scmp.ne.s32.totalorder %s141, %s155
      %p157 = scmp.eq.s32.totalorder %s26, 0
      %p158 = por %p156, %p157
      %s159 = ssub.s32 %s20, %s27
      %p160 = scmp.eq.s32.totalorder %s159, 0
      %s162 = sadd.s32 %s161, 1
      %s163 = scalar_select %p160, %s161, %s162
      %p166 = pneg %p160
      %p167 = scmp.eq.s32.totalorder %s20, 1
      %p168 = por %p166, %p167
      %p169 = scmp.ne.s32.totalorder %s161, %s164
      %p170 = scmp.eq.s32.totalorder %s20, 0
      %p171 = por %p169, %p170
      %p172 = scmp.ne.s32.totalorder %s161, %s164
      %p173 = scmp.eq.s32.totalorder %s25, 1
      %p174 = por %p172, %p173
      %p175 = scmp.ne.s32.totalorder %s164, %s165
      %p176 = scmp.eq.s32.totalorder %s25, 0
      %p177 = por %p175, %p176
      %p178 = scmp.ne.s32.totalorder %s164, %s165
      %p179 = scmp.eq.s32.totalorder %s26, 1
      %p180 = por %p178, %p179
      %p182 = scmp.ne.s32.totalorder %s165, %s181
      %p183 = scmp.eq.s32.totalorder %s26, 0
      %p184 = por %p182, %p183
      %p185 = scmp.le.s32.totalorder 1, %s20
      %p186 = scmp.lt.s32.totalorder %s20, 3
      %p187 = pnand %p185, %p186
      %p188 = pneg %p187
      // Predicated region
      $region9: #{tpu_custom_call.1} parent=5 // pred_check
        _
      $region10: #{tpu_custom_call.1} parent=5 // pred_check_branch
        %190 = sbr.rel (%p187) target = $region12
      $region11: #{tpu_custom_call.1} parent=5 // pred_region
        %s191 = ssub.s32 %s20, 1
        // Predicated region
        $region13: #{tpu_custom_call.1} parent=11 // pred_check
          %p192 = pneg %p67
        $region14: #{tpu_custom_call.1} parent=11 // pred_check_branch
          %194 = sbr.rel (%p192) target = $region16
        $region15: #{tpu_custom_call.1} parent=11 // pred_region
          %s196 = ssub.s32 512, 512
          %197 = vsyncadd [#allocation6], %s196
          %s198 = sshll.u32 [#allocation5], 4
          %s199 = int_to_ptr.vmem [resolvable:$true] %s198
          %204 = dma.hbm_to_vmem [thread:$0]  %s1, 512, %s199, [#allocation6], 128, 128, 8
        $region16: #{tpu_custom_call.1} parent=11 // pred_fallthru
          _
        // Predicated region
        $region17: #{tpu_custom_call.1} parent=11 // pred_check
          %p205 = pneg %p88
        $region18: #{tpu_custom_call.1} parent=11 // pred_check_branch
          %207 = sbr.rel (%p205) target = $region20
        $region19: #{tpu_custom_call.1} parent=11 // pred_region
          %s209 = ssub.s32 512, 512
          %210 = vsyncadd [#allocation6], %s209
          %s211 = sshll.u32 [#allocation7], 4
          %s212 = int_to_ptr.vmem [resolvable:$true] %s211
          %217 = dma.hbm_to_vmem [thread:$0]  %s2, 512, %s212, [#allocation6], 128, 128, 8
        $region20: #{tpu_custom_call.1} parent=11 // pred_fallthru
          _
        // Predicated region
        $region21: #{tpu_custom_call.1} parent=11 // pred_check
          %p218 = pneg %p109
        $region22: #{tpu_custom_call.1} parent=11 // pred_check_branch
          %220 = sbr.rel (%p218) target = $region24
        $region23: #{tpu_custom_call.1} parent=11 // pred_region
          _
        $region24: #{tpu_custom_call.1} parent=11 // pred_fallthru
          _
        // Predicated region
        $region25: #{tpu_custom_call.1} parent=11 // pred_check
          %p221 = pneg %p130
        $region26: #{tpu_custom_call.1} parent=11 // pred_check_branch
          %223 = sbr.rel (%p221) target = $region28
        $region27: #{tpu_custom_call.1} parent=11 // pred_region
          %s225 = ssub.s32 128, 128
          %226 = vsyncadd [#allocation9], %s225
          %s228 = sshll.u32 [#allocation8], 4
          %s229 = int_to_ptr.vmem [resolvable:$true] %s228
          %231 = dma.hbm_to_vmem [thread:$0]  %s4, 128, %s229, [#allocation9]
        $region28: #{tpu_custom_call.1} parent=11 // pred_fallthru
          _
        // Predicated region
        $region29: #{tpu_custom_call.1} parent=11 // pred_check
          %p232 = pneg %p151
        $region30: #{tpu_custom_call.1} parent=11 // pred_check_branch
          %234 = sbr.rel (%p232) target = $region32
        $region31: #{tpu_custom_call.1} parent=11 // pred_region
          _
        $region32: #{tpu_custom_call.1} parent=11 // pred_fallthru
          _
      $region12: #{tpu_custom_call.1} parent=5 // pred_fallthru
        _
      %p235 = scmp.lt.s32.totalorder %s20, 2
      // Predicated region
      $region33: #{tpu_custom_call.1} parent=5 // pred_check
        %p236 = pneg %p235
      $region34: #{tpu_custom_call.1} parent=5 // pred_check_branch
        %238 = sbr.rel (%p236) target = $region36
      $region35: #{tpu_custom_call.1} parent=5 // pred_region
        // Predicated region
        $region37: #{tpu_custom_call.1} parent=35 // pred_check
          %p239 = pneg %p40
        $region38: #{tpu_custom_call.1} parent=35 // pred_check_branch
          %241 = sbr.rel (%p239) target = $region40
        $region39: #{tpu_custom_call.1} parent=35 // pred_region
          %s242 = sand.u32 %s30, 1
          %s243 = scalar_lea.sflag [#allocation3], %s242
          %s244 = sand.u32 %s30, 1
          %s245 = smul.addr %s244, 8
          %s246 = scalar_lea.vmem [#allocation2], %s245
          %s248 = ssub.s32 128, 128
          %249 = vsyncadd %s243, %s248
          %s250 = smul.addr %s20, 128
          %s251 = scalar_lea.hbm %s0, %s250
          %s253 = sshll.u32 %s246, 4
          %s254 = int_to_ptr.vmem [resolvable:$true] %s253
          %256 = dma.hbm_to_vmem [thread:$0]  %s251, 128, %s254, %s243
        $region40: #{tpu_custom_call.1} parent=35 // pred_fallthru
          _
      $region36: #{tpu_custom_call.1} parent=5 // pred_fallthru
        _
      %p257 = scmp.le.s32.totalorder 1, %s20
      %p258 = scmp.lt.s32.totalorder %s20, 3
      %p259 = pnand %p257, %p258
      %p260 = pneg %p259
      // Predicated region
      $region41: #{tpu_custom_call.1} parent=5 // pred_check
        _
      $region42: #{tpu_custom_call.1} parent=5 // pred_check_branch
        %262 = sbr.rel (%p259) target = $region44
      $region43: #{tpu_custom_call.1} parent=5 // pred_region
        %s263 = ssub.s32 %s20, 1
        %s264 = sand.u32 %s33, 1
        %s265 = scalar_lea.sflag [#allocation3], %s264
        %s266 = sand.u32 %s33, 1
        %s267 = smul.addr %s266, 8
        %s268 = scalar_lea.vmem [#allocation2], %s267
        // Predicated region
        $region45: #{tpu_custom_call.1} parent=43 // pred_check
          %p269 = pneg %p46
        $region46: #{tpu_custom_call.1} parent=43 // pred_check_branch
          %271 = sbr.rel (%p269) target = $region48
        $region47: #{tpu_custom_call.1} parent=43 // pred_region
          %272 = dma.done %s265, 128
        $region48: #{tpu_custom_call.1} parent=43 // pred_fallthru
          _
        // Predicated region
        $region49: #{tpu_custom_call.1} parent=43 // pred_check
          %p273 = pneg %p67
        $region50: #{tpu_custom_call.1} parent=43 // pred_check_branch
          %275 = sbr.rel (%p273) target = $region52
        $region51: #{tpu_custom_call.1} parent=43 // pred_region
          %276 = dma.done [#allocation6], 512
        $region52: #{tpu_custom_call.1} parent=43 // pred_fallthru
          _
        // Predicated region
        $region53: #{tpu_custom_call.1} parent=43 // pred_check
          %p277 = pneg %p88
        $region54: #{tpu_custom_call.1} parent=43 // pred_check_branch
          %279 = sbr.rel (%p277) target = $region56
        $region55: #{tpu_custom_call.1} parent=43 // pred_region
          %280 = dma.done [#allocation6], 512
        $region56: #{tpu_custom_call.1} parent=43 // pred_fallthru
          _
        // Predicated region
        $region57: #{tpu_custom_call.1} parent=43 // pred_check
          %p281 = pneg %p130
        $region58: #{tpu_custom_call.1} parent=43 // pred_check_branch
          %283 = sbr.rel (%p281) target = $region60
        $region59: #{tpu_custom_call.1} parent=43 // pred_region
          %284 = dma.done [#allocation9], 128
        $region60: #{tpu_custom_call.1} parent=43 // pred_fallthru
          _
        %s285 = sand.u32 %s33, 1
        %s286 = scalar_lea.sflag [#allocation3], %s285
        %s287 = sand.u32 %s33, 1
        %s288 = smul.addr %s287, 8
        %s289 = scalar_lea.vmem [#allocation2], %s288
        %p290 = pneg %p46
        %p291 = pneg %p43
        %p292 = pneg %p67
        %p293 = pneg %p64
        %p294 = pneg %p88
        %p295 = pneg %p85
        %p296 = pneg %p109
        %p297 = pneg %p106
        %p298 = pneg %p130
        %p299 = pneg %p127
        %p300 = pneg %p151
        %p301 = pneg %p148
        %p302 = pneg %p177
        %p303 = pneg %p174
        %s304 = sand.u32 %s164, 1
        %s305 = scalar_lea.sflag [#allocation4], %s304
        %s306 = sand.u32 %s164, 1
        %s307 = smul.addr %s306, 8
        %s308 = scalar_lea.vmem [#allocation10], %s307
        %v309 = vld [vmem:[%s268] sm:$0xff]
        %v310 = vld [vmem:[#allocation7] sm:$0xff]
        %v311 = vld [vmem:[#allocation7 + $0x8] sm:$0xff]
        %v312 = vld [vmem:[#allocation7 + $0x10] sm:$0xff]
        %v313 = vld [vmem:[#allocation7 + $0x18] sm:$0xff]
        %v314 = vld [vmem:[%s3] sm:$0x1]
        %v316 = vlaneseq
        %v317 = vshrl.u32 %v316, 7
        %v318 = vsub.s32 0, %v317
        %v319 = vrot.slane %v314, %v318
        %vm321 = vcmask 261120
        %v323 = vsel %vm321, %v309, 0
        %325 = vmatprep.subr.mxu0 0.0
        %326 = vmatpush1.msra.mxu0 0.0
        %327 = vmatprep.subr.mxu0 0.0
        %328 = vmatpush1.msra.mxu0 0.0
        %329 = vmatprep.subr.mxu0 0.0
        %330 = vmatpush1.msra.mxu0 0.0
        %331 = vmatprep.subr.mxu0 0.0
        %332 = vmatpush1.msra.mxu0 0.0
        %333 = vmatprep.subr.mxu0 0.0
        %334 = vmatpush1.msra.mxu0 0.0
        %335 = vmatprep.subr.mxu0 0.0
        %336 = vmatpush1.msra.mxu0 0.0
        %337 = vmatprep.subr.mxu0 0.0
        %338 = vmatpush1.msra.mxu0 0.0
        %339 = vmatprep.subr.mxu0 0.0
        %340 = vmatpush1.msra.mxu0 0.0
        %341 = vmatprep.subr.mxu0 0.0
        %342 = vmatpush1.msra.mxu0 0.0
        %343 = vmatprep.subr.mxu0 0.0
        %344 = vmatpush1.msra.mxu0 0.0
        %345 = vmatprep.subr.mxu0 0.0
        %346 = vmatpush1.msra.mxu0 0.0
        %347 = vmatprep.subr.mxu0 0.0
        %348 = vmatpush1.msra.mxu0 0.0
        %349 = vmatprep.subr.mxu0 0.0
        %350 = vmatpush1.msra.mxu0 %v313
        %351 = vmatprep.subr.mxu0 0.0
        %352 = vmatpush1.msra.mxu0 %v312
        %353 = vmatprep.subr.mxu0 0.0
        %354 = vmatpush1.msra.mxu0 %v311
        %355 = vmatprep.subr.mxu0 0.0
        %356 = vmatpush1.msra.mxu0 %v310
        %357 = vmatprep.subr.mxu0 0.0
        %358 = vmatpush2.msra.mxu0 0.0
        %359 = vmatprep.subr.mxu0 0.0
        %360 = vmatpush2.msra.mxu0 0.0
        %361 = vmatprep.subr.mxu0 0.0
        %362 = vmatpush2.msra.mxu0 0.0
        %363 = vmatprep.subr.mxu0 0.0
        %364 = vmatpush2.msra.mxu0 0.0
        %365 = vmatprep.subr.mxu0 0.0
        %366 = vmatpush2.msra.mxu0 0.0
        %367 = vmatprep.subr.mxu0 0.0
        %368 = vmatpush2.msra.mxu0 0.0
        %369 = vmatprep.subr.mxu0 0.0
        %370 = vmatpush2.msra.mxu0 0.0
        %371 = vmatprep.subr.mxu0 0.0
        %372 = vmatpush2.msra.mxu0 0.0
        %373 = vmatprep.subr.mxu0 0.0
        %374 = vmatpush2.msra.mxu0 0.0
        %375 = vmatprep.subr.mxu0 0.0
        %376 = vmatpush2.msra.mxu0 0.0
        %377 = vmatprep.subr.mxu0 0.0
        %378 = vmatpush2.msra.mxu0 0.0
        %379 = vmatprep.subr.mxu0 0.0
        %380 = vmatpush2.msra.mxu0 0.0
        %381 = vmatprep.subr.mxu0 0.0
        %382 = vmatpush2.msra.mxu0 0.0
        %383 = vmatprep.subr.mxu0 0.0
        %384 = vmatpush2.msra.mxu0 0.0
        %385 = vmatprep.subr.mxu0 0.0
        %386 = vmatpush2.msra.mxu0 0.0
        %387 = vmatprep.subr.mxu0 0.0
        %388 = vmatpush2.msra.mxu0 0.0
        %389 = vmatprep.mubr.f32.mxu0 0.0
        %390 = vmatmul.mubr.f32.gmra.mxu0 %v323
        %v391 = vpop.f32.mrf.mxu0
        %v392 = vadd.f32 %v319, %v391
        %v393 = vpop.f32.mrf.mxu0
        %394 = vdwg.mxu0
        %396 = vrot.lane.b32.xlu0 %v392, 120
        %v397 = vpop.permute.xlu0 %396
        %398 = vrot.lane.b32.xlu0 %v392, 112
        %v399 = vpop.permute.xlu0 %398
        %400 = vrot.lane.b32.xlu0 %v392, 104
        %v401 = vpop.permute.xlu0 %400
        %402 = vrot.lane.b32.xlu0 %v392, 96
        %v403 = vpop.permute.xlu0 %402
        %404 = vrot.lane.b32.xlu0 %v397, 96
        %v405 = vpop.permute.xlu0 %404
        %406 = vrot.lane.b32.xlu0 %v399, 96
        %v407 = vpop.permute.xlu0 %406
        %408 = vrot.lane.b32.xlu0 %v401, 96
        %v409 = vpop.permute.xlu0 %408
        %vm410 = vcmask 64512
        %v411 = vsel %vm410, %v392, 0
        %v413 = vsel %vm410, %v397, 0
        %v415 = vsel %vm410, %v399, 0
        %v417 = vsel %vm410, %v401, 0
        %v419 = vsel %vm410, %v403, 0
        %v421 = vsel %vm410, %v405, 0
        %v423 = vsel %vm410, %v407, 0
        %v425 = vsel %vm410, %v409, 0
        %427 = vmatprep.subr.mxu0 0.0
        %428 = vmatpush1.xpose.msra.mxu0 0.0
        %429 = vmatprep.subr.mxu0 0.0
        %430 = vmatpush1.xpose.msra.mxu0 0.0
        %431 = vmatprep.subr.mxu0 0.0
        %432 = vmatpush1.xpose.msra.mxu0 0.0
        %433 = vmatprep.subr.mxu0 0.0
        %434 = vmatpush1.xpose.msra.mxu0 0.0
        %435 = vmatprep.subr.mxu0 0.0
        %436 = vmatpush1.xpose.msra.mxu0 0.0
        %437 = vmatprep.subr.mxu0 0.0
        %438 = vmatpush1.xpose.msra.mxu0 0.0
        %439 = vmatprep.subr.mxu0 0.0
        %440 = vmatpush1.xpose.msra.mxu0 0.0
        %441 = vmatprep.subr.mxu0 0.0
        %442 = vmatpush1.xpose.msra.mxu0 0.0
        %443 = vmatprep.subr.mxu0 0.0
        %444 = vmatpush1.xpose.msra.mxu0 0.0
        %445 = vmatprep.subr.mxu0 0.0
        %446 = vmatpush1.xpose.msra.mxu0 0.0
        %447 = vmatprep.subr.mxu0 0.0
        %448 = vmatpush1.xpose.msra.mxu0 0.0
        %449 = vmatprep.subr.mxu0 0.0
        %450 = vmatpush1.xpose.msra.mxu0 0.0
        %451 = vmatprep.subr.mxu0 0.0
        %452 = vmatpush1.xpose.msra.mxu0 %v425
        %453 = vmatprep.subr.mxu0 0.0
        %454 = vmatpush1.xpose.msra.mxu0 %v423
        %455 = vmatprep.subr.mxu0 0.0
        %456 = vmatpush1.xpose.msra.mxu0 %v421
        %457 = vmatprep.subr.mxu0 0.0
        %458 = vmatpush1.xpose.msra.mxu0 %v419
        %459 = vmatprep.subr.mxu0 0.0
        %460 = vmatpush2.xpose.msra.mxu0 0.0
        %461 = vmatprep.subr.mxu0 0.0
        %462 = vmatpush2.xpose.msra.mxu0 0.0
        %463 = vmatprep.subr.mxu0 0.0
        %464 = vmatpush2.xpose.msra.mxu0 0.0
        %465 = vmatprep.subr.mxu0 0.0
        %466 = vmatpush2.xpose.msra.mxu0 0.0
        %467 = vmatprep.subr.mxu0 0.0
        %468 = vmatpush2.xpose.msra.mxu0 0.0
        %469 = vmatprep.subr.mxu0 0.0
        %470 = vmatpush2.xpose.msra.mxu0 0.0
        %471 = vmatprep.subr.mxu0 0.0
        %472 = vmatpush2.xpose.msra.mxu0 0.0
        %473 = vmatprep.subr.mxu0 0.0
        %474 = vmatpush2.xpose.msra.mxu0 0.0
        %475 = vmatprep.subr.mxu0 0.0
        %476 = vmatpush2.xpose.msra.mxu0 0.0
        %477 = vmatprep.subr.mxu0 0.0
        %478 = vmatpush2.xpose.msra.mxu0 0.0
        %479 = vmatprep.subr.mxu0 0.0
        %480 = vmatpush2.xpose.msra.mxu0 0.0
        %481 = vmatprep.subr.mxu0 0.0
        %482 = vmatpush2.xpose.msra.mxu0 0.0
        %483 = vmatprep.subr.mxu0 0.0
        %484 = vmatpush2.xpose.msra.mxu0 0.0
        %485 = vmatprep.subr.mxu0 0.0
        %486 = vmatpush2.xpose.msra.mxu0 0.0
        %487 = vmatprep.subr.mxu0 0.0
        %488 = vmatpush2.xpose.msra.mxu0 0.0
        %489 = vmatprep.subr.mxu0 0.0
        %490 = vmatpush2.xpose.msra.mxu0 0.0
        %491 = vmatprep.mubr.f32.mxu0 0.0
        %492 = vmatmul.mubr.f32.gmra.mxu0 %v411
        %v493 = vpop.f32.mrf.mxu0
        %v494 = vadd.f32 0.0, %v493
        %v495 = vpop.f32.mrf.mxu0
        %496 = vmatprep.mubr.f32.mxu0 0.0
        %497 = vmatmul.mubr.f32.gmra.mxu0 %v413
        %v498 = vpop.f32.mrf.mxu0
        %v499 = vadd.f32 0.0, %v498
        %v500 = vpop.f32.mrf.mxu0
        %501 = vmatprep.mubr.f32.mxu0 0.0
        %502 = vmatmul.mubr.f32.gmra.mxu0 %v415
        %v503 = vpop.f32.mrf.mxu0
        %v504 = vadd.f32 0.0, %v503
        %v505 = vpop.f32.mrf.mxu0
        %506 = vmatprep.mubr.f32.mxu0 0.0
        %507 = vmatmul.mubr.f32.gmra.mxu0 %v417
        %v508 = vpop.f32.mrf.mxu0
        %v509 = vadd.f32 0.0, %v508
        %v510 = vpop.f32.mrf.mxu0
        %511 = vdwg.mxu0
        %v512 = vmul.f32 %v494, 0.17677669
        %v513 = vmul.f32 %v499, 0.17677669
        %v514 = vmul.f32 %v504, 0.17677669
        %v515 = vmul.f32 %v509, 0.17677669
        %v516 = vld [vmem:[#allocation5] sm:$0xff]
        %v517 = vld [vmem:[#allocation5 + $0x8] sm:$0xff]
        %v518 = vld [vmem:[#allocation5 + $0x10] sm:$0xff]
        %v519 = vld [vmem:[#allocation5 + $0x18] sm:$0xff]
        %v520 = vadd.f32 %v512, %v516
        %v521 = vadd.f32 %v513, %v517
        %v522 = vadd.f32 %v514, %v518
        %v523 = vadd.f32 %v515, %v519
        %v524 = vsel %vm321, %v520, -inf
        %525 = vmax.xlane.f32.xlu0 %v524
        %v526 = vpop.xlane.xlu0 %525
        %v527 = vsel %vm321, %v521, -inf
        %528 = vmax.xlane.f32.xlu0 %v527
        %v529 = vpop.xlane.xlu0 %528
        %v530 = vsel %vm321, %v522, -inf
        %531 = vmax.xlane.f32.xlu0 %v530
        %v532 = vpop.xlane.xlu0 %531
        %v533 = vsel %vm321, %v523, -inf
        %534 = vmax.xlane.f32.xlu0 %v533
        %v535 = vpop.xlane.xlu0 %534
        %v536 = vsub.f32 %v520, %v526
        %v537 = vsub.f32 %v521, %v529
        %v538 = vsub.f32 %v522, %v532
        %v539 = vsub.f32 %v523, %v535
        %v540 = vmul.f32 %v536, 1.442695
        %v541 = vpow.pop %v540
        %v542 = vmul.f32 %v537, 1.442695
        %v543 = vpow.pop %v542
        %v544 = vmul.f32 %v538, 1.442695
        %v545 = vpow.pop %v544
        %v546 = vmul.f32 %v539, 1.442695
        %v547 = vpow.pop %v546
        %v548 = vsel %vm321, %v541, 0.0
        %549 = vadd.xlane.f32.xlu0 %v548
        %v550 = vpop.xlane.xlu0 %549
        %v551 = vsel %vm321, %v543, 0.0
        %552 = vadd.xlane.f32.xlu0 %v551
        %v553 = vpop.xlane.xlu0 %552
        %v554 = vsel %vm321, %v545, 0.0
        %555 = vadd.xlane.f32.xlu0 %v554
        %v556 = vpop.xlane.xlu0 %555
        %v557 = vsel %vm321, %v547, 0.0
        %558 = vadd.xlane.f32.xlu0 %v557
        %v559 = vpop.xlane.xlu0 %558
        %v560 = vrcp.pop %v550
        %v561 = vmul.f32 %v541, %v560
        %v562 = vrcp.pop %v553
        %v563 = vmul.f32 %v543, %v562
        %v564 = vrcp.pop %v556
        %v565 = vmul.f32 %v545, %v564
        %v566 = vrcp.pop %v559
        %v567 = vmul.f32 %v547, %v566
        %568 = vrot.lane.b32.xlu0 %v392, 64
        %v569 = vpop.permute.xlu0 %568
        %570 = vrot.lane.b32.xlu0 %v397, 64
        %v571 = vpop.permute.xlu0 %570
        %572 = vrot.lane.b32.xlu0 %v399, 64
        %v573 = vpop.permute.xlu0 %572
        %574 = vrot.lane.b32.xlu0 %v401, 64
        %v575 = vpop.permute.xlu0 %574
        %v581 = vsel %vm321, %v561, 0
        %v584 = vsel %vm321, %v563, 0
        %v587 = vsel %vm321, %v565, 0
        %v590 = vsel %vm321, %v567, 0
        %592 = vmatprep.subr.mxu0 0.0
        %593 = vmatpush1.msra.mxu0 0.0
        %594 = vmatprep.subr.mxu0 0.0
        %595 = vmatpush1.msra.mxu0 0.0
        %596 = vmatprep.subr.mxu0 0.0
        %597 = vmatpush1.msra.mxu0 0.0
        %598 = vmatprep.subr.mxu0 0.0
        %599 = vmatpush1.msra.mxu0 0.0
        %600 = vmatprep.subr.mxu0 0.0
        %601 = vmatpush1.msra.mxu0 0.0
        %602 = vmatprep.subr.mxu0 0.0
        %603 = vmatpush1.msra.mxu0 0.0
        %604 = vmatprep.subr.mxu0 0.0
        %605 = vmatpush1.msra.mxu0 0.0
        %606 = vmatprep.subr.mxu0 0.0
        %607 = vmatpush1.msra.mxu0 0.0
        %608 = vmatprep.subr.mxu0 0.0
        %609 = vmatpush1.msra.mxu0 0.0
        %610 = vmatprep.subr.mxu0 0.0
        %611 = vmatpush1.msra.mxu0 0.0
        %612 = vmatprep.subr.mxu0 0.0
        %613 = vmatpush1.msra.mxu0 0.0
        %614 = vmatprep.subr.mxu0 0.0
        %615 = vmatpush1.msra.mxu0 0.0
        %616 = vmatprep.subr.mxu0 0.0
        %617 = vmatpush1.msra.mxu0 %v575
        %618 = vmatprep.subr.mxu0 0.0
        %619 = vmatpush1.msra.mxu0 %v573
        %620 = vmatprep.subr.mxu0 0.0
        %621 = vmatpush1.msra.mxu0 %v571
        %622 = vmatprep.subr.mxu0 0.0
        %623 = vmatpush1.msra.mxu0 %v569
        %624 = vmatprep.subr.mxu0 0.0
        %625 = vmatpush2.msra.mxu0 0.0
        %626 = vmatprep.subr.mxu0 0.0
        %627 = vmatpush2.msra.mxu0 0.0
        %628 = vmatprep.subr.mxu0 0.0
        %629 = vmatpush2.msra.mxu0 0.0
        %630 = vmatprep.subr.mxu0 0.0
        %631 = vmatpush2.msra.mxu0 0.0
        %632 = vmatprep.subr.mxu0 0.0
        %633 = vmatpush2.msra.mxu0 0.0
        %634 = vmatprep.subr.mxu0 0.0
        %635 = vmatpush2.msra.mxu0 0.0
        %636 = vmatprep.subr.mxu0 0.0
        %637 = vmatpush2.msra.mxu0 0.0
        %638 = vmatprep.subr.mxu0 0.0
        %639 = vmatpush2.msra.mxu0 0.0
        %640 = vmatprep.subr.mxu0 0.0
        %641 = vmatpush2.msra.mxu0 0.0
        %642 = vmatprep.subr.mxu0 0.0
        %643 = vmatpush2.msra.mxu0 0.0
        %644 = vmatprep.subr.mxu0 0.0
        %645 = vmatpush2.msra.mxu0 0.0
        %646 = vmatprep.subr.mxu0 0.0
        %647 = vmatpush2.msra.mxu0 0.0
        %648 = vmatprep.subr.mxu0 0.0
        %649 = vmatpush2.msra.mxu0 0.0
        %650 = vmatprep.subr.mxu0 0.0
        %651 = vmatpush2.msra.mxu0 0.0
        %652 = vmatprep.subr.mxu0 0.0
        %653 = vmatpush2.msra.mxu0 0.0
        %654 = vmatprep.subr.mxu0 0.0
        %655 = vmatpush2.msra.mxu0 0.0
        %656 = vmatprep.mubr.f32.mxu0 0.0
        %657 = vmatmul.mubr.f32.gmra.mxu0 %v581
        %v658 = vpop.f32.mrf.mxu0
        %v659 = vadd.f32 0.0, %v658
        %v660 = vpop.f32.mrf.mxu0
        %661 = vmatprep.mubr.f32.mxu0 0.0
        %662 = vmatmul.mubr.f32.gmra.mxu0 %v584
        %v663 = vpop.f32.mrf.mxu0
        %v664 = vadd.f32 0.0, %v663
        %v665 = vpop.f32.mrf.mxu0
        %666 = vmatprep.mubr.f32.mxu0 0.0
        %667 = vmatmul.mubr.f32.gmra.mxu0 %v587
        %v668 = vpop.f32.mrf.mxu0
        %v669 = vadd.f32 0.0, %v668
        %v670 = vpop.f32.mrf.mxu0
        %671 = vmatprep.mubr.f32.mxu0 0.0
        %672 = vmatmul.mubr.f32.gmra.mxu0 %v590
        %v673 = vpop.f32.mrf.mxu0
        %v674 = vadd.f32 0.0, %v673
        %v675 = vpop.f32.mrf.mxu0
        %676 = vdwg.mxu0
        %v677 = vld [vmem:[#allocation8] sm:$0xff]
        %v679 = vsel %vm410, %v659, 0
        %v682 = vsel %vm410, %v664, 0
        %v685 = vsel %vm410, %v669, 0
        %v688 = vsel %vm410, %v674, 0
        %690 = vmatprep.subr.mxu0 0.0
        %691 = vmatpush1.msra.mxu0 0.0
        %692 = vmatprep.subr.mxu0 0.0
        %693 = vmatpush1.msra.mxu0 0.0
        %694 = vmatprep.subr.mxu0 0.0
        %695 = vmatpush1.msra.mxu0 0.0
        %696 = vmatprep.subr.mxu0 0.0
        %697 = vmatpush1.msra.mxu0 0.0
        %698 = vmatprep.subr.mxu0 0.0
        %699 = vmatpush1.msra.mxu0 0.0
        %700 = vmatprep.subr.mxu0 0.0
        %701 = vmatpush1.msra.mxu0 0.0
        %702 = vmatprep.subr.mxu0 0.0
        %703 = vmatpush1.msra.mxu0 0.0
        %704 = vmatprep.subr.mxu0 0.0
        %705 = vmatpush1.msra.mxu0 0.0
        %706 = vmatprep.subr.mxu0 0.0
        %707 = vmatpush1.msra.mxu0 0.0
        %708 = vmatprep.subr.mxu0 0.0
        %709 = vmatpush1.msra.mxu0 0.0
        %710 = vmatprep.subr.mxu0 0.0
        %711 = vmatpush1.msra.mxu0 0.0
        %712 = vmatprep.subr.mxu0 0.0
        %713 = vmatpush1.msra.mxu0 0.0
        %714 = vmatprep.subr.mxu0 0.0
        %715 = vmatpush1.msra.mxu0 0.0
        %716 = vmatprep.subr.mxu0 0.0
        %717 = vmatpush1.msra.mxu0 0.0
        %718 = vmatprep.subr.mxu0 0.0
        %719 = vmatpush1.msra.mxu0 0.0
        %720 = vmatprep.subr.mxu0 0.0
        %721 = vmatpush1.msra.mxu0 %v677
        %722 = vmatprep.subr.mxu0 0.0
        %723 = vmatpush2.msra.mxu0 0.0
        %724 = vmatprep.subr.mxu0 0.0
        %725 = vmatpush2.msra.mxu0 0.0
        %726 = vmatprep.subr.mxu0 0.0
        %727 = vmatpush2.msra.mxu0 0.0
        %728 = vmatprep.subr.mxu0 0.0
        %729 = vmatpush2.msra.mxu0 0.0
        %730 = vmatprep.subr.mxu0 0.0
        %731 = vmatpush2.msra.mxu0 0.0
        %732 = vmatprep.subr.mxu0 0.0
        %733 = vmatpush2.msra.mxu0 0.0
        %734 = vmatprep.subr.mxu0 0.0
        %735 = vmatpush2.msra.mxu0 0.0
        %736 = vmatprep.subr.mxu0 0.0
        %737 = vmatpush2.msra.mxu0 0.0
        %738 = vmatprep.subr.mxu0 0.0
        %739 = vmatpush2.msra.mxu0 0.0
        %740 = vmatprep.subr.mxu0 0.0
        %741 = vmatpush2.msra.mxu0 0.0
        %742 = vmatprep.subr.mxu0 0.0
        %743 = vmatpush2.msra.mxu0 0.0
        %744 = vmatprep.subr.mxu0 0.0
        %745 = vmatpush2.msra.mxu0 0.0
        %746 = vmatprep.subr.mxu0 0.0
        %747 = vmatpush2.msra.mxu0 0.0
        %748 = vmatprep.subr.mxu0 0.0
        %749 = vmatpush2.msra.mxu0 0.0
        %750 = vmatprep.subr.mxu0 0.0
        %751 = vmatpush2.msra.mxu0 0.0
        %752 = vmatprep.subr.mxu0 0.0
        %753 = vmatpush2.msra.mxu0 0.0
        %754 = vmatprep.mubr.f32.mxu0 0.0
        %755 = vmatmul.mubr.f32.gmra.mxu0 %v679
        %v756 = vpop.f32.mrf.mxu0
        %v757 = vadd.f32 0.0, %v756
        %v758 = vpop.f32.mrf.mxu0
        %759 = vmatprep.mubr.f32.mxu0 0.0
        %760 = vmatmul.mubr.f32.gmra.mxu0 %v682
        %v761 = vpop.f32.mrf.mxu0
        %v762 = vadd.f32 0.0, %v761
        %v763 = vpop.f32.mrf.mxu0
        %764 = vmatprep.mubr.f32.mxu0 0.0
        %765 = vmatmul.mubr.f32.gmra.mxu0 %v685
        %v766 = vpop.f32.mrf.mxu0
        %v767 = vadd.f32 0.0, %v766
        %v768 = vpop.f32.mrf.mxu0
        %769 = vmatprep.mubr.f32.mxu0 0.0
        %770 = vmatmul.mubr.f32.gmra.mxu0 %v688
        %v771 = vpop.f32.mrf.mxu0
        %v772 = vadd.f32 0.0, %v771
        %v773 = vpop.f32.mrf.mxu0
        %774 = vdwg.mxu0
        %776 = vrot.lane.b32.xlu0 %v762, 96
        %v777 = vpop.permute.xlu0 %776
        %v779 = vadd.f32 %v757, %v777
        %781 = vrot.lane.b32.xlu0 %v767, 64
        %v782 = vpop.permute.xlu0 %781
        %v784 = vadd.f32 %v779, %v782
        %786 = vrot.lane.b32.xlu0 %v772, 32
        %v787 = vpop.permute.xlu0 %786
        %v789 = vadd.f32 %v784, %v787
        %v790 = vld [vmem:[%s5] sm:$0x1]
        %v792 = vlaneseq
        %v793 = vshrl.u32 %v792, 7
        %v794 = vsub.s32 0, %v793
        %v795 = vrot.slane %v790, %v794
        %v797 = vadd.f32 %v789, %v795
        %798 = vst.msk [vmem:[%s308] sm:$0xff] %vm321, %v797
        %s799 = sand.u32 %s164, 1
        %s800 = scalar_lea.sflag [#allocation4], %s799
        %s801 = sand.u32 %s164, 1
        %s802 = smul.addr %s801, 8
        %s803 = scalar_lea.vmem [#allocation10], %s802
        // Predicated region
        $region61: #{tpu_custom_call.1} parent=43 // pred_check
          %p804 = pneg %p174
        $region62: #{tpu_custom_call.1} parent=43 // pred_check_branch
          %806 = sbr.rel (%p804) target = $region64
        $region63: #{tpu_custom_call.1} parent=43 // pred_region
          %s808 = ssub.s32 128, 128
          %809 = vsyncadd %s800, %s808
          %s810 = smul.addr %s25, 128
          %s811 = scalar_lea.hbm %s6, %s810
          %s813 = sshll.u32 %s803, 4
          %s814 = int_to_ptr.vmem [resolvable:$true] %s813
          %816 = dma.vmem_to_hbm [thread:$0]  %s814, 128, %s811, %s800
        $region64: #{tpu_custom_call.1} parent=43 // pred_fallthru
          _
      $region44: #{tpu_custom_call.1} parent=5 // pred_fallthru
        _
      %p817 = scmp.le.s32.totalorder 2, %s20
      // Predicated region
      $region65: #{tpu_custom_call.1} parent=5 // pred_check
        %p818 = pneg %p817
      $region66: #{tpu_custom_call.1} parent=5 // pred_check_branch
        %820 = sbr.rel (%p818) target = $region68
      $region67: #{tpu_custom_call.1} parent=5 // pred_region
        %s821 = ssub.s32 %s20, 2
        // Predicated region
        $region69: #{tpu_custom_call.1} parent=67 // pred_check
          %p822 = pneg %p180
        $region70: #{tpu_custom_call.1} parent=67 // pred_check_branch
          %824 = sbr.rel (%p822) target = $region72
        $region71: #{tpu_custom_call.1} parent=67 // pred_region
          %s825 = sand.u32 %s165, 1
          %s826 = scalar_lea.sflag [#allocation4], %s825
          %s827 = sand.u32 %s165, 1
          %s828 = smul.addr %s827, 8
          %s829 = scalar_lea.vmem [#allocation10], %s828
          %830 = dma.done %s826, 128
        $region72: #{tpu_custom_call.1} parent=67 // pred_fallthru
          _
      $region68: #{tpu_custom_call.1} parent=5 // pred_fallthru
        _
    $region6: #{tpu_custom_call.1} parent=1 // loop_footer
      %s24 = sadd.s32 1, %s20
    $region7: #{tpu_custom_call.1} parent=1 // loop_footer_branch
      %19 = sbr.rel target = $region3
    $region8: #{tpu_custom_call.1} parent=1 // loop_exit
      _
    %831 = vsyncpa [#allocation3], 1
    %s832 = scalar_lea.sflag [#allocation3], 1
    %833 = vsyncpa %s832, 1
    %834 = vsyncpa [#allocation6], 1
    %835 = vsyncpa [#allocation9], 1
    %836 = vsyncpa [#allocation4], 1
    %s837 = scalar_lea.sflag [#allocation4], 1
    %838 = vsyncpa %s837, 1

</llo_original>
